<compile_context>
chip_gen: v5e
topology: v5e:2x2
jax: 0.10.0
libtpu: 0.0.40
codegen_flags: <defaults>
</compile_context>

<pallas_src>
import math

import jax
import jax.numpy as jnp
from jax import lax
from jax.experimental import pallas as pl
from jax.experimental.pallas import tpu as pltpu


def _patch_embed_kernel(p_ref, w_ref, pos_ref, cls_ref, out_ref):
    """One grid step = one M tile of patch rows of one batch element.

    p_ref:   (1, TM, K)   bf16 flattened patches for this tile (streamed)
    w_ref:   (K, D)       bf16 flattened conv weight (resident, constant)
    pos_ref: (N, D)       f32 patch position embeddings (resident, constant)
    cls_ref: (1, D)       f32 class_embedding + pos[0] (resident, constant)
    out_ref: (1, N+1, D)  full output slab of this batch element; revisited
                          across the inner M axis, flushed to HBM once per b.
    """
    m = pl.program_id(1)
    tm = p_ref.shape[1]

    # (TM, K) @ (K, D) on the MXU, f32 accumulation.
    acc = jnp.dot(p_ref[0], w_ref[...], preferred_element_type=jnp.float32)

    r0 = pl.multiple_of(m * tm, tm)                    # aligned pos-row offset
    vals = acc + pos_ref[pl.ds(r0, tm), :]
    # Patch rows live at token offset +1 (class token is token 0): a
    # sublane-misaligned masked store — VMEM-only cost, no extra HBM pass.
    out_ref[0, pl.ds(r0 + 1, tm), :] = vals.astype(out_ref.dtype)

    @pl.when(m == 0)
    def _():
        out_ref[0, 0:1, :] = cls_ref[...].astype(out_ref.dtype)


def _choose_tile_m(batch, n_patches, target=256, min_steps=8):
    """M tile: a divisor of N, preferably 16-aligned (bf16 packs two rows per
    sublane), <= target, and small enough that the grid has >= min_steps total
    steps when possible (pipeline depth + both v7x TensorCores busy)."""
    divs = [d for d in range(1, n_patches + 1) if n_patches % d == 0]
    for align in (16, 8):
        cand = [d for d in divs if d % align == 0 and d <= target]
        if not cand:
            continue
        enough = [d for d in cand if batch * (n_patches // d) >= min_steps]
        return max(enough) if enough else min(cand)
    return n_patches                     # no aligned divisor: one tile of N


def _vmem_limit_bytes():
    # Derive the scoped-VMEM cap from the chip (v7x: 64 MiB -> 48 MiB,
    # v5e/v6e: 128 MiB -> 96 MiB) instead of hard-coding the v7x number.
    try:
        cap = int(pltpu.get_tpu_info().vmem_capacity_bytes)
    except Exception:  # capability query only; assume the smallest generation
        cap = 64 * 1024 * 1024
    return int(min(cap * 3 // 4, 100 * 1024 * 1024))


def clip_vision_embeddings(pixel_values, conv_weight, class_embedding,
                           pos_weight, out_dtype=None):
    """pixel_values: (B, C, H, W)  (NCHW, like PyTorch)
    conv_weight:     (D, C, P, P)  Conv2d weight (bias=False, stride=P)
    class_embedding: (D,)
    pos_weight:      (num_positions, D), num_positions = (H//P)*(W//P) + 1
    returns:         (B, 1 + h*w, D)
    """
    B, C, H, W = pixel_values.shape
    D, Cw, P, _ = conv_weight.shape
    assert C == Cw
    h, w = H // P, W // P
    N = h * w
    K = C * P * P

    num_positions = pos_weight.shape[0]
    size = int(math.sqrt(num_positions - 1))
    if size != h or size != w:
        # TODO(synk): bicubic antialiased position-embedding interpolation
        # (F.interpolate mode='bicubic', antialias=True) has no clean Pallas
        # equivalent; only the size == h == w path is implemented.
        raise NotImplementedError("position-embedding interpolation path")

    if out_dtype is None:
        out_dtype = pixel_values.dtype

    # --- im2col glue: cast to bf16 BEFORE the relayout (halves the bytes the
    # transpose copy rewrites; under jit the convert fuses into that copy).
    # (B, C, h, P, w, P) -> (B, h, w, C, P, P) -> (B, N, K).  No K padding:
    # Mosaic lane-pads the full-K blocks in VMEM for free.
    patches = pixel_values.astype(jnp.bfloat16).reshape(B, C, h, P, w, P)
    patches = patches.transpose(0, 2, 4, 1, 3, 5).reshape(B, N, K)
    # (D, C, P, P) -> (K, D), bf16 for the MXU.
    w_flat = conv_weight.reshape(D, K).T.astype(jnp.bfloat16)

    pos_patch = pos_weight[1:].astype(jnp.float32)                # (N, D)
    cls_row = (class_embedding.astype(jnp.float32)
               + pos_weight[0].astype(jnp.float32)).reshape(1, D)  # (1, D)

    TM = _choose_tile_m(B, N)
    n_m = N // TM

    grid_spec = pltpu.PrefetchScalarGridSpec(
        num_scalar_prefetch=0,
        grid=(B, n_m),
        in_specs=[
            # streamed per step (double-buffered by the Pallas pipeline)
            pl.BlockSpec((1, TM, K), lambda b, m: (b, m, 0)),
            # constant block index -> DMA'd once, VMEM-resident for the grid
            pl.BlockSpec((K, D), lambda b, m: (0, 0)),
            pl.BlockSpec((N, D), lambda b, m: (0, 0)),
            pl.BlockSpec((1, D), lambda b, m: (0, 0)),
        ],
        # One (N+1, D) slab per batch element, revisited across the inner M
        # axis (class row + every patch tile written before it flushes).
        out_specs=pl.BlockSpec((1, N + 1, D), lambda b, m: (b, 0, 0)),
    )

    return pl.pallas_call(
        _patch_embed_kernel,
        out_shape=jax.ShapeDtypeStruct((B, N + 1, D), out_dtype),
        grid_spec=grid_spec,
        compiler_params=pltpu.CompilerParams(
            dimension_semantics=("parallel", "arbitrary"),
            vmem_limit_bytes=_vmem_limit_bytes(),
        ),
    )(patches, w_flat, pos_patch, cls_row)


def _reference(pixel_values, conv_weight, class_embedding, pos_weight):
    """Pure-JAX f32 reference mirroring the PyTorch forward (no-interp path)."""
    B = pixel_values.shape[0]
    P = conv_weight.shape[-1]
    patch_embeds = lax.conv_general_dilated(
        pixel_values, conv_weight, window_strides=(P, P), padding="VALID",
        dimension_numbers=("NCHW", "OIHW", "NCHW"),
    )  # (B, D, h, w)
    Bc, D, h, w = patch_embeds.shape
    patch_embeds = patch_embeds.reshape(B, D, h * w).transpose(0, 2, 1)
    class_embeds = jnp.broadcast_to(class_embedding.reshape(1, 1, D), (B, 1, D))
    embeddings = jnp.concatenate([class_embeds, patch_embeds], axis=1)
    return embeddings + pos_weight[None, :, :]


if __name__ == "__main__":
    # Small CLIP-like config: image 32x32, patch 4 -> h = w = 8, 64 patches,
    # 65 positions, embed_dim 128 (lane-dense), 3 input channels, batch 2.
    # With TM=16 this gives grid=(2, 4) = 8 steps, exercising the revisited
    # output block, the misaligned patch-row stores and the class-row branch.
    B, C, H, W = 2, 3, 32, 32
    P = 4
    D = 128
    h, w = H // P, W // P
    num_positions = h * w + 1

    key = jax.random.PRNGKey(0)
    k_px, k_w, k_cls, k_pos = jax.random.split(key, 4)

    pixel_values = jax.random.normal(k_px, (B, C, H, W), dtype=jnp.float32)
    conv_weight = jax.random.normal(k_w, (D, C, P, P), dtype=jnp.float32) * 0.02
    class_embedding = jax.random.normal(k_cls, (D,), dtype=jnp.float32) * 0.02
    pos_weight = jax.random.normal(k_pos, (num_positions, D), dtype=jnp.float32) * 0.02

    fn = jax.jit(clip_vision_embeddings)
    out = jax.block_until_ready(fn(pixel_values, conv_weight,
                                   class_embedding, pos_weight))

    ref = _reference(pixel_values, conv_weight, class_embedding, pos_weight)
    assert out.shape == (B, num_positions, D), out.shape
    max_err = float(jnp.max(jnp.abs(out - ref)))
    # bf16 matmul operands with f32 accumulation vs f32 XLA conv reference;
    # error grows ~sqrt(K), comfortably below 2e-2 for K = C*P*P = 48.
    assert max_err < 2e-2, max_err
    print("KERNEL_OK")
</pallas_src>

<mosaic_0001>
module attributes {stable_mosaic.version = 11 : i64} {
  func.func @_patch_embed_kernel(%arg0: i32, %arg1: i32, %arg2: memref<1x16x48xbf16, #tpu.memory_space<vmem>>, %arg3: memref<48x128xbf16, #tpu.memory_space<vmem>>, %arg4: memref<64x128xf32, #tpu.memory_space<vmem>>, %arg5: memref<1x128xf32, #tpu.memory_space<vmem>>, %arg6: memref<1x65x128xf32, #tpu.memory_space<vmem>>) attributes {dimension_semantics = [#tpu.dimension_semantics<parallel>, #tpu.dimension_semantics<arbitrary>], iteration_bounds = array<i64: 2, 4>, scalar_prefetch = 0 : i64, scratch_operands = 0 : i64, tpu.core_type = #tpu.core_type<tc>, window_params = [{transform_indices = @transform_0, window_bounds = array<i64: 1, 16, 48>}, {pipeline_mode = #tpu.pipeline_mode<synchronous>, transform_indices = @transform_1, window_bounds = array<i64: 48, 128>}, {pipeline_mode = #tpu.pipeline_mode<synchronous>, transform_indices = @transform_2, window_bounds = array<i64: 64, 128>}, {pipeline_mode = #tpu.pipeline_mode<synchronous>, transform_indices = @transform_3, window_bounds = array<i64: 1, 128>}, {transform_indices = @transform_4, window_bounds = array<i64: 1, 65, 128>}]} {
    %c0 = arith.constant 0 : index
    %c0_0 = arith.constant 0 : index
    %c0_1 = arith.constant 0 : index
    %0 = vector.load %arg2[%c0, %c0_0, %c0_1] : memref<1x16x48xbf16, #tpu.memory_space<vmem>>, vector<1x16x48xbf16>
    %1 = vector.shape_cast %0 : vector<1x16x48xbf16> to vector<16x48xbf16>
    %c0_2 = arith.constant 0 : index
    %c0_3 = arith.constant 0 : index
    %2 = vector.load %arg3[%c0_2, %c0_3] : memref<48x128xbf16, #tpu.memory_space<vmem>>, vector<48x128xbf16>
    %cst = arith.constant dense<0.000000e+00> : vector<16x128xf32>
    %3 = tpu.matmul %1, %2, %cst {dimension_numbers = #tpu.dot_dimension_numbers<[1], [0], [0], [1], [0, 0, 1, 1], [], []>} : vector<16x48xbf16>, vector<48x128xbf16>, vector<16x128xf32> -> vector<16x128xf32>
    %c16_i32 = arith.constant 16 : i32
    %4 = arith.muli %arg1, %c16_i32 : i32
    %5 = tpu.assume_multiple %4, 16 : i32
    %6 = arith.index_cast %5 : i32 to index
    %c0_4 = arith.constant 0 : index
    %7 = vector.load %arg4[%6, %c0_4] : memref<64x128xf32, #tpu.memory_space<vmem>>, vector<16x128xf32>
    %8 = arith.addf %3, %7 : vector<16x128xf32>
    %c1_i32 = arith.constant 1 : i32
    %9 = arith.addi %5, %c1_i32 : i32
    %c0_5 = arith.constant 0 : index
    %10 = arith.index_cast %9 : i32 to index
    %c0_6 = arith.constant 0 : index
    %11 = vector.load %arg6[%c0_5, %10, %c0_6] : memref<1x65x128xf32, #tpu.memory_space<vmem>>, vector<1x16x128xf32>
    %12 = vector.shape_cast %11 : vector<1x16x128xf32> to vector<16x128xf32>
    %13 = vector.shape_cast %8 : vector<16x128xf32> to vector<1x16x128xf32>
    tpu.vector_store %arg6[%c0_5, %10, %c0_6], %13 {strides = array<i32>} : memref<1x65x128xf32, #tpu.memory_space<vmem>>, vector<1x16x128xf32>,
    %c0_i32 = arith.constant 0 : i32
    %14 = arith.cmpi eq, %arg1, %c0_i32 : i32
    %15 = arith.extui %14 : i1 to i32
    %c0_i32_7 = arith.constant 0 : i32
    %16 = arith.cmpi ne, %15, %c0_i32_7 : i32
    scf.if %16 {
      %c0_8 = arith.constant 0 : index
      %c0_9 = arith.constant 0 : index
      %17 = vector.load %arg5[%c0_8, %c0_9] : memref<1x128xf32, #tpu.memory_space<vmem>>, vector<1x128xf32>
      %c0_10 = arith.constant 0 : index
      %c0_11 = arith.constant 0 : index
      %c0_12 = arith.constant 0 : index
      %18 = vector.load %arg6[%c0_10, %c0_11, %c0_12] : memref<1x65x128xf32, #tpu.memory_space<vmem>>, vector<1x1x128xf32>
      %19 = vector.shape_cast %18 : vector<1x1x128xf32> to vector<1x128xf32>
      %20 = vector.shape_cast %17 : vector<1x128xf32> to vector<1x1x128xf32>
      tpu.vector_store %arg6[%c0_10, %c0_11, %c0_12], %20 {strides = array<i32>} : memref<1x65x128xf32, #tpu.memory_space<vmem>>, vector<1x1x128xf32>,
    } else {
    }
    return
  }
  func.func @transform_0(%arg0: i32, %arg1: i32) -> (i32, i32, i32) {
    %c0_i32 = arith.constant 0 : i32
    %c0_i32_0 = arith.constant 0 : i32
    return %arg0, %arg1, %c0_i32 : i32, i32, i32
  }
  func.func @transform_1(%arg0: i32, %arg1: i32) -> (i32, i32) {
    %c0_i32 = arith.constant 0 : i32
    %c0_i32_0 = arith.constant 0 : i32
    %c0_i32_1 = arith.constant 0 : i32
    return %c0_i32, %c0_i32_0 : i32, i32
  }
  func.func @transform_2(%arg0: i32, %arg1: i32) -> (i32, i32) {
    %c0_i32 = arith.constant 0 : i32
    %c0_i32_0 = arith.constant 0 : i32
    %c0_i32_1 = arith.constant 0 : i32
    return %c0_i32, %c0_i32_0 : i32, i32
  }
  func.func @transform_3(%arg0: i32, %arg1: i32) -> (i32, i32) {
    %c0_i32 = arith.constant 0 : i32
    %c0_i32_0 = arith.constant 0 : i32
    %c0_i32_1 = arith.constant 0 : i32
    return %c0_i32, %c0_i32_0 : i32, i32
  }
  func.func @transform_4(%arg0: i32, %arg1: i32) -> (i32, i32, i32) {
    %c0_i32 = arith.constant 0 : i32
    %c0_i32_0 = arith.constant 0 : i32
    %c0_i32_1 = arith.constant 0 : i32
    return %arg0, %c0_i32, %c0_i32_0 : i32, i32, i32
  }
}

</mosaic_0001>

<llo_original>
// kernel: clip_vision_embeddings.1
$region0: #{clip_vision_embeddings.1}
  #allocation0 [shape = 'u32[]', space=smem, size = 0x4, offset = 0x4, fixed_abs, tag = 'smem constant byte address 0x4 - core index']
  #allocation1 [shape = 'u32[72,128]{1,0:T(1,128)}', space=vmem, size = 0x9000, scoped, tag = 'internal scratch']
  %s0 = inlined_call_operand.vmem [shape: bf16[2,64,48], index: 0, kind: input, shape index: {}]
  %s1 = inlined_call_operand.vmem [shape: bf16[48,128], index: 1, kind: input, shape index: {}]
  %s2 = inlined_call_operand.vmem [shape: f32[64,128], index: 2, kind: input, shape index: {}]
  %s3 = inlined_call_operand.vmem [shape: f32[1,128], index: 3, kind: input, shape index: {}]
  %s4 = inlined_call_operand.vmem [shape: f32[2,65,128], index: 4, kind: output, shape index: {}]
  %s5 = sld [smem:[#allocation0]]
  $region53: #{clip_vision_embeddings.1} parent=0
    _
  %s7 = ssub.s32 1, %s5
  %s8 = scalar_select 0, %s7, %s5
  loop: start=0, step=1, limit=10
  $region2: #{clip_vision_embeddings.1} parent=0 // loop_pre_header
    _
  $region3: #{clip_vision_embeddings.1} parent=0 // loop_header
    %s10 = sphi 0, %s14
    %p11 = scmp.ge.s32.totalorder %s10, 10
    %s17 = sphi 0, %s29
    %s18 = sphi 0, %s25
    %s19 = sphi 0, %s17
    %s20 = sphi 0, %s18
    %s21 = sphi 0, %s19
    %s22 = sphi 0, %s20
    %s34 = sphi 0, %s36
    %s37 = sphi 0, %s34
    %s38 = sphi 0, %s37
    %s54 = sphi 0, %s38
    %s58 = sphi 0, %s58
    %s60 = sphi 0, %s58
    %s61 = sphi 0, %s60
    %s75 = sphi 0, %s61
    %s79 = sphi 0, %s79
    %s81 = sphi 0, %s79
    %s82 = sphi 0, %s81
    %s96 = sphi 0, %s82
    %s100 = sphi 0, %s100
    %s102 = sphi 0, %s100
    %s103 = sphi 0, %s102
    %s117 = sphi 0, %s103
    %s123 = sphi 0, %s125
    %s126 = sphi 0, %s123
    %s127 = sphi 0, %s126
    %s143 = sphi 0, %s127
  $region4: #{clip_vision_embeddings.1} parent=0 // loop_header_branch
    %13 = sbr.rel (%p11) target = $region8
  $region5: #{clip_vision_embeddings.1} parent=0 // loop_body
    %s15 = ssub.s32 %s10, 1
    %s16 = ssub.s32 %s10, 2
    %s23 = sadd.s32 1, %s18
    %p24 = scmp.ge.s32.totalorder %s23, 4
    %s25 = scalar_select %p24, 0, %s23
    %s26 = sadd.s32 1, %s17
    %s27 = scalar_select %p24, %s26, %s17
    %p28 = scmp.ge.s32.totalorder %s27, 2
    %s29 = scalar_select %p28, 0, %s27
    %s30 = ssub.s32 %s17, %s29
    %s31 = ssub.s32 %s18, %s25
    %s32 = sor.u32 %s30, %s31
    %p33 = scmp.eq.s32.totalorder %s32, 0
    %s35 = sadd.s32 %s34, 1
    %s36 = scalar_select %p33, %s34, %s35
    %p39 = pneg %p33
    %p40 = scmp.eq.s32.totalorder %s10, 7
    %p41 = por %p39, %p40
    %p42 = scmp.ne.s32.totalorder %s34, %s37
    %p43 = scmp.eq.s32.totalorder %s10, 0
    %p44 = por %p42, %p43
    %p45 = scmp.ne.s32.totalorder %s34, %s37
    %p46 = scmp.eq.s32.totalorder %s15, 7
    %p47 = por %p45, %p46
    %p48 = scmp.ne.s32.totalorder %s37, %s38
    %p49 = scmp.eq.s32.totalorder %s15, 0
    %p50 = por %p48, %p49
    %p51 = scmp.ne.s32.totalorder %s37, %s38
    %p52 = scmp.eq.s32.totalorder %s16, 7
    %p53 = por %p51, %p52
    %p55 = scmp.ne.s32.totalorder %s38, %s54
    %p56 = scmp.eq.s32.totalorder %s16, 0
    %p57 = por %p55, %p56
    %s59 = sadd.s32 %s58, 1
    %p62 = scmp.eq.s32.totalorder %s10, 7
    %p63 = scmp.ne.s32.totalorder %s58, %s60
    %p64 = scmp.eq.s32.totalorder %s10, 0
    %p65 = por %p63, %p64
    %p66 = scmp.ne.s32.totalorder %s58, %s60
    %p67 = scmp.eq.s32.totalorder %s15, 7
    %p68 = por %p66, %p67
    %p69 = scmp.ne.s32.totalorder %s60, %s61
    %p70 = scmp.eq.s32.totalorder %s15, 0
    %p71 = por %p69, %p70
    %p72 = scmp.ne.s32.totalorder %s60, %s61
    %p73 = scmp.eq.s32.totalorder %s16, 7
    %p74 = por %p72, %p73
    %p76 = scmp.ne.s32.totalorder %s61, %s75
    %p77 = scmp.eq.s32.totalorder %s16, 0
    %p78 = por %p76, %p77
    %s80 = sadd.s32 %s79, 1
    %p83 = scmp.eq.s32.totalorder %s10, 7
    %p84 = scmp.ne.s32.totalorder %s79, %s81
    %p85 = scmp.eq.s32.totalorder %s10, 0
    %p86 = por %p84, %p85
    %p87 = scmp.ne.s32.totalorder %s79, %s81
    %p88 = scmp.eq.s32.totalorder %s15, 7
    %p89 = por %p87, %p88
    %p90 = scmp.ne.s32.totalorder %s81, %s82
    %p91 = scmp.eq.s32.totalorder %s15, 0
    %p92 = por %p90, %p91
    %p93 = scmp.ne.s32.totalorder %s81, %s82
    %p94 = scmp.eq.s32.totalorder %s16, 7
    %p95 = por %p93, %p94
    %p97 = scmp.ne.s32.totalorder %s82, %s96
    %p98 = scmp.eq.s32.totalorder %s16, 0
    %p99 = por %p97, %p98
    %s101 = sadd.s32 %s100, 1
    %p104 = scmp.eq.s32.totalorder %s10, 7
    %p105 = scmp.ne.s32.totalorder %s100, %s102
    %p106 = scmp.eq.s32.totalorder %s10, 0
    %p107 = por %p105, %p106
    %p108 = scmp.ne.s32.totalorder %s100, %s102
    %p109 = scmp.eq.s32.totalorder %s15, 7
    %p110 = por %p108, %p109
    %p111 = scmp.ne.s32.totalorder %s102, %s103
    %p112 = scmp.eq.s32.totalorder %s15, 0
    %p113 = por %p111, %p112
    %p114 = scmp.ne.s32.totalorder %s102, %s103
    %p115 = scmp.eq.s32.totalorder %s16, 7
    %p116 = por %p114, %p115
    %p118 = scmp.ne.s32.totalorder %s103, %s117
    %p119 = scmp.eq.s32.totalorder %s16, 0
    %p120 = por %p118, %p119
    %s121 = ssub.s32 %s17, %s29
    %p122 = scmp.eq.s32.totalorder %s121, 0
    %s124 = sadd.s32 %s123, 1
    %s125 = scalar_select %p122, %s123, %s124
    %p128 = pneg %p122
    %p129 = scmp.eq.s32.totalorder %s10, 7
    %p130 = por %p128, %p129
    %p131 = scmp.ne.s32.totalorder %s123, %s126
    %p132 = scmp.eq.s32.totalorder %s10, 0
    %p133 = por %p131, %p132
    %p134 = scmp.ne.s32.totalorder %s123, %s126
    %p135 = scmp.eq.s32.totalorder %s15, 7
    %p136 = por %p134, %p135
    %p137 = scmp.ne.s32.totalorder %s126, %s127
    %p138 = scmp.eq.s32.totalorder %s15, 0
    %p139 = por %p137, %p138
    %p140 = scmp.ne.s32.totalorder %s126, %s127
    %p141 = scmp.eq.s32.totalorder %s16, 7
    %p142 = por %p140, %p141
    %p144 = scmp.ne.s32.totalorder %s127, %s143
    %p145 = scmp.eq.s32.totalorder %s16, 0
    %p146 = por %p144, %p145
    %p147 = scmp.le.s32.totalorder 1, %s10
    %p148 = scmp.lt.s32.totalorder %s10, 9
    %p149 = pnand %p147, %p148
    %p150 = pneg %p149
    // Predicated region
    $region9: #{clip_vision_embeddings.1} parent=5 // pred_check
      _
    $region10: #{clip_vision_embeddings.1} parent=5 // pred_check_branch
      %152 = sbr.rel (%p149) target = $region12
    $region11: #{clip_vision_embeddings.1} parent=5 // pred_region
      %s153 = ssub.s32 %s10, 1
      // Predicated region
      $region13: #{clip_vision_embeddings.1} parent=11 // pred_check
        %p154 = pneg %p71
      $region14: #{clip_vision_embeddings.1} parent=11 // pred_check_branch
        %156 = sbr.rel (%p154) target = $region16
      $region15: #{clip_vision_embeddings.1} parent=11 // pred_region
        _
      $region16: #{clip_vision_embeddings.1} parent=11 // pred_fallthru
        _
      // Predicated region
      $region17: #{clip_vision_embeddings.1} parent=11 // pred_check
        %p157 = pneg %p92
      $region18: #{clip_vision_embeddings.1} parent=11 // pred_check_branch
        %159 = sbr.rel (%p157) target = $region20
      $region19: #{clip_vision_embeddings.1} parent=11 // pred_region
        _
      $region20: #{clip_vision_embeddings.1} parent=11 // pred_fallthru
        _
      // Predicated region
      $region21: #{clip_vision_embeddings.1} parent=11 // pred_check
        %p160 = pneg %p113
      $region22: #{clip_vision_embeddings.1} parent=11 // pred_check_branch
        %162 = sbr.rel (%p160) target = $region24
      $region23: #{clip_vision_embeddings.1} parent=11 // pred_region
        _
      $region24: #{clip_vision_embeddings.1} parent=11 // pred_fallthru
        _
    $region12: #{clip_vision_embeddings.1} parent=5 // pred_fallthru
      _
    %p163 = scmp.lt.s32.totalorder %s10, 8
    // Predicated region
    $region25: #{clip_vision_embeddings.1} parent=5 // pred_check
      %p164 = pneg %p163
    $region26: #{clip_vision_embeddings.1} parent=5 // pred_check_branch
      %166 = sbr.rel (%p164) target = $region28
    $region27: #{clip_vision_embeddings.1} parent=5 // pred_region
      // Predicated region
      $region29: #{clip_vision_embeddings.1} parent=27 // pred_check
        %p167 = pneg %p44
      $region30: #{clip_vision_embeddings.1} parent=27 // pred_check_branch
        %169 = sbr.rel (%p167) target = $region32
      $region31: #{clip_vision_embeddings.1} parent=27 // pred_region
        %s170 = smul.u32 2, %s18
        %p171 = scmp.lt.s32.totalorder %s17, 1
        %s172 = scalar_select %p171, %s17, 1
        %p173 = scmp.lt.s32.totalorder %s170, 7
        %s174 = scalar_select %p173, %s170, 7
        %s175 = smul.addr %s172, 8
        %s176 = sadd.s32 %s174, %s175
        %s177 = smul.addr %s176, 4
        %s178 = scalar_lea.vmem %s0, %s177
        %s179 = smul.u32 2, %s18
      $region32: #{clip_vision_embeddings.1} parent=27 // pred_fallthru
        _
    $region28: #{clip_vision_embeddings.1} parent=5 // pred_fallthru
      _
    %p180 = scmp.le.s32.totalorder 1, %s10
    %p181 = scmp.lt.s32.totalorder %s10, 9
    %p182 = pnand %p180, %p181
    %p183 = pneg %p182
    // Predicated region
    $region33: #{clip_vision_embeddings.1} parent=5 // pred_check
      _
    $region34: #{clip_vision_embeddings.1} parent=5 // pred_check_branch
      %185 = sbr.rel (%p182) target = $region36
    $region35: #{clip_vision_embeddings.1} parent=5 // pred_region
      %s186 = ssub.s32 %s10, 1
      %s187 = smul.u32 2, %s20
      %p188 = scmp.lt.s32.totalorder %s19, 1
      %s189 = scalar_select %p188, %s19, 1
      %p190 = scmp.lt.s32.totalorder %s187, 7
      %s191 = scalar_select %p190, %s187, 7
      %s192 = smul.addr %s189, 8
      %s193 = sadd.s32 %s191, %s192
      %s194 = smul.addr %s193, 4
      %s195 = scalar_lea.vmem %s0, %s194
      %p196 = pneg %p50
      %p197 = pneg %p47
      %p198 = pneg %p71
      %p199 = pneg %p68
      %p200 = pneg %p92
      %p201 = pneg %p89
      %p202 = pneg %p113
      %p203 = pneg %p110
      %p204 = pneg %p139
      %p205 = pneg %p136
      %p206 = scmp.lt.s32.totalorder %s19, 1
      %s207 = scalar_select %p206, %s19, 1
      %s208 = smul.addr %s207, 9
      %s209 = smul.addr %s208, 8
      %s210 = scalar_lea.vmem %s4, %s209
      %s211 = smul.u32 2, %s20
      %p212 = scmp.lt.s32.totalorder %s19, 1
      %s213 = scalar_select %p212, %s19, 1
      %p214 = scmp.lt.s32.totalorder %s211, 7
      %s215 = scalar_select %p214, %s211, 7
      %s216 = smul.addr %s213, 8
      %s217 = sadd.s32 %s215, %s216
      %s218 = smul.addr %s217, 4
      %s219 = scalar_lea.vmem %s0, %s218
      %s220 = smul.u32 2, %s20
      %p221 = scmp.lt.s32.totalorder %s19, 1
      %s222 = scalar_select %p221, %s19, 1
      %s223 = smul.addr %s222, 9
      %s224 = smul.addr %s223, 8
      %s225 = scalar_lea.vmem %s4, %s224
      %v227 = vld [vmem:[%s219] sm:$0xf]
      %v228 = vld [vmem:[%s219 + $0x4] sm:$0xf]
      %v229 = vld [vmem:[%s1] sm:$0xf]
      %v230 = vld [vmem:[%s1 + $0x4] sm:$0xf]
      %v231 = vld [vmem:[%s1 + $0x8] sm:$0xf]
      %v232 = vld [vmem:[%s1 + $0xc] sm:$0xf]
      %v233 = vld [vmem:[%s1 + $0x10] sm:$0xf]
      %v234 = vld [vmem:[%s1 + $0x14] sm:$0xf]
      %s235 = smul.u32 %s20, 16
      %s236 = scalar_lea.vmem %s2, %s235
      %v237 = vld [vmem:[%s236] sm:$0xff]
      %v238 = vld [vmem:[%s236 + $0x8] sm:$0xff]
      %v241 = vunpack.c.l.b16 %v227
      %v242 = vunpack.c.l.b16 %v228
      %v243 = vpack.c.b16 %v242, %v241
      %v250 = vunpack.c.l.b16 %v229
      %v251 = vunpack.c.l.b16 %v230
      %v252 = vunpack.c.l.b16 %v231
      %v253 = vunpack.c.l.b16 %v232
      %v254 = vunpack.c.l.b16 %v233
      %v255 = vunpack.c.l.b16 %v234
      %v256 = vpack.c.b16 %v251, %v250
      %v257 = vpack.c.b16 %v253, %v252
      %v258 = vpack.c.b16 %v255, %v254
      %vm262 = vcmask 392192
      %v264 = vsel %vm262, %v243, 0
      %266 = vmatpush.bf16.msra.mxu0 0
      %267 = vmatpush.bf16.msra.mxu0 0
      %268 = vmatpush.bf16.msra.mxu0 0
      %269 = vmatpush.bf16.msra.mxu0 0
      %270 = vmatpush.bf16.msra.mxu0 0
      %271 = vmatpush.bf16.msra.mxu0 %v258
      %272 = vmatpush.bf16.msra.mxu0 %v257
      %273 = vmatpush.bf16.msra.mxu0 %v256
      %274 = vmatmul.bf16.gmra.mxu0 %v264
      %v275 = vpop.f32.mrf.mxu0
      %v276 = vadd.f32 %v237, %v275
      %v277 = vpop.f32.mrf.mxu0
      %v278 = vadd.f32 %v238, %v277
      %279 = vdwg.mxu0
      %s280 = sadd.s32 %s235, 1
      %s281 = scalar_lea.vmem %s225, %s280
      %282 = vst [vmem:[%s281] sm:$0xff] %v276
      %283 = vst [vmem:[%s281 + $0x8] sm:$0xff] %v278
      %p284 = scmp.eq.s32.totalorder %s20, 0
      // Predicated region
      $region37: #{clip_vision_embeddings.1} parent=35 // pred_check
        %p285 = pneg %p284
      $region38: #{clip_vision_embeddings.1} parent=35 // pred_check_branch
        %287 = sbr.rel (%p285) target = $region40
      $region39: #{clip_vision_embeddings.1} parent=35 // pred_region
        %v288 = vld [vmem:[%s3] sm:$0x1]
        %289 = vst [vmem:[%s225] sm:$0x1] %v288
      $region40: #{clip_vision_embeddings.1} parent=35 // pred_fallthru
        _
      %p290 = scmp.lt.s32.totalorder %s19, 1
      %s291 = scalar_select %p290, %s19, 1
      %s292 = smul.addr %s291, 9
      %s293 = smul.addr %s292, 8
      %s294 = scalar_lea.vmem %s4, %s293
      // Predicated region
      $region41: #{clip_vision_embeddings.1} parent=35 // pred_check
        %p295 = pneg %p136
      $region42: #{clip_vision_embeddings.1} parent=35 // pred_check_branch
        %297 = sbr.rel (%p295) target = $region44
      $region43: #{clip_vision_embeddings.1} parent=35 // pred_region
        _
      $region44: #{clip_vision_embeddings.1} parent=35 // pred_fallthru
        _
    $region36: #{clip_vision_embeddings.1} parent=5 // pred_fallthru
      _
    %p298 = scmp.le.s32.totalorder 2, %s10
    // Predicated region
    $region45: #{clip_vision_embeddings.1} parent=5 // pred_check
      %p299 = pneg %p298
    $region46: #{clip_vision_embeddings.1} parent=5 // pred_check_branch
      %301 = sbr.rel (%p299) target = $region48
    $region47: #{clip_vision_embeddings.1} parent=5 // pred_region
      %s302 = ssub.s32 %s10, 2
      // Predicated region
      $region49: #{clip_vision_embeddings.1} parent=47 // pred_check
        %p303 = pneg %p142
      $region50: #{clip_vision_embeddings.1} parent=47 // pred_check_branch
        %305 = sbr.rel (%p303) target = $region52
      $region51: #{clip_vision_embeddings.1} parent=47 // pred_region
        %p306 = scmp.lt.s32.totalorder %s21, 1
        %s307 = scalar_select %p306, %s21, 1
        %s308 = smul.addr %s307, 9
        %s309 = smul.addr %s308, 8
        %s310 = scalar_lea.vmem %s4, %s309
      $region52: #{clip_vision_embeddings.1} parent=47 // pred_fallthru
        _
    $region48: #{clip_vision_embeddings.1} parent=5 // pred_fallthru
      _
  $region6: #{clip_vision_embeddings.1} parent=0 // loop_footer
    %s14 = sadd.s32 1, %s10
  $region7: #{clip_vision_embeddings.1} parent=0 // loop_footer_branch
    %9 = sbr.rel target = $region3
  $region8: #{clip_vision_embeddings.1} parent=0 // loop_exit
    _

</llo_original>
